<compile_context>
chip_gen: v6e
topology: v6e:2x2x1
jax: 0.10.0
libtpu: 0.0.40
codegen_flags: <defaults>
</compile_context>

<pallas_src>
import functools

import jax
import jax.numpy as jnp
from jax.experimental import pallas as pl
from jax.experimental.pallas import tpu as pltpu


def _criterion_kernel(tiles_ref, nvalid_ref, labels_ref, logits_ref, rowsum_ref,
                      *, bf16_compute):
    # tiles_ref : SMEM (nb,) int32        -- #T-tiles actually needed per batch block (scalar prefetch)
    # nvalid_ref: VMEM (bt, 1, 1) int32   -- length_i - 1 per row of this batch block
    # labels_ref: VMEM (bt, tt, 1) int32  -- shifted targets for this tile
    # logits_ref: VMEM (bt, tt, V)        -- f32 or bf16 logits tile
    # rowsum_ref: VMEM (bt, 1, 1) f32     -- per-row masked CE sum (resident across the T axis)
    bb = pl.program_id(0)
    t = pl.program_id(1)

    @pl.when(t == 0)
    def _init():
        rowsum_ref[...] = jnp.zeros_like(rowsum_ref)

    @pl.when(t < tiles_ref[bb])
    def _compute():
        logits = logits_ref[...]                                  # (bt, tt, V) native dtype
        targets = labels_ref[...]                                 # (bt, tt, 1) int32
        bt, tt, V = logits.shape

        # Row max in the native dtype (exact, XLU reduce).
        m = jnp.max(logits, axis=-1, keepdims=True)               # (bt, tt, 1)
        m32 = m.astype(jnp.float32)

        # Target logit via one-hot compare against a (1,1,V) lane iota (broadcasts lazily;
        # no (bt,tt,V) int32 temporary). Single-nonzero select/sum is exact in native dtype.
        col = jax.lax.broadcasted_iota(jnp.int32, (1, 1, V), 2)
        tgt = jnp.sum(jnp.where(col == targets, logits, 0),
                      axis=-1, keepdims=True).astype(jnp.float32)  # (bt, tt, 1)

        # Stable logsumexp; the subtract/exp chain is the only full-block temporary.
        if bf16_compute:
            # bf16 subtract halves the per-element VALU work on v6e/v7x; exp-sum stays f32.
            sh32 = (logits - m).astype(jnp.float32)
        else:
            sh32 = logits.astype(jnp.float32) - m32
        sumexp = jnp.sum(jnp.exp(sh32), axis=-1, keepdims=True)    # (bt, tt, 1) f32

        ce = (m32 + jnp.log(sumexp)) - tgt                         # (bt, tt, 1) f32

        # Token index t_global = t*tt + row; valid iff t_global < length - 1.
        # jnp.where (not multiply) so garbage in padded/OOB tile rows cannot poison the sum.
        tok = jax.lax.broadcasted_iota(jnp.int32, (1, tt, 1), 1) + t * tt
        valid = tok < nvalid_ref[...]                              # (bt, tt, 1) bool
        rowsum_ref[...] += jnp.sum(jnp.where(valid, ce, 0.0), axis=1, keepdims=True)


def _tpu_vmem_limit_bytes():
    """~3/4 of per-core VMEM: ~96 MiB on v5e/v6e (128 MiB), ~48 MiB on v7x (64 MiB)."""
    cap = 64 * 1024 * 1024  # conservative fallback (safe on every generation)
    try:
        info = pltpu.get_tpu_info()
        cap = int(getattr(info, "vmem_capacity_bytes", cap)) or cap
    except Exception:
        pass
    return (cap * 3) // 4


def _choose_tiles(B, T, V, itemsize, vmem_limit_bytes, tt=None, bt=None):
    """Pick (tt, bt) so each logits block is as large as the per-generation VMEM budget allows."""
    # Budget: 2x block (double-buffered logits DMA) + ~3x block of f32 in-kernel temporaries,
    # plus slack for labels / nvalid / rowsum buffers and compiler scratch.
    per_elem = 2 * itemsize + 3 * 4
    slack = 2 * 1024 * 1024
    max_elems = max(8 * 128, (vmem_limit_bytes - slack) // per_elem)
    max_block_bytes = int(min(max_elems * itemsize, 16 * 1024 * 1024))

    if tt is None:
        row_bytes = max(1, V * itemsize)
        tt0 = max(1, max_block_bytes // row_bytes)
        tt = T if tt0 >= T else min(max(8, (tt0 // 8) * 8), T)
    assert tt == T or tt % 8 == 0, "tt must be a multiple of 8 or equal to T"

    if bt is None:
        tile_bytes = max(1, tt * V * itemsize)
        bt_budget = max(1, max_block_bytes // tile_bytes)
        # Keep at least two batch blocks so the "parallel" axis can split across the two
        # TensorCores of a v7x chip (harmless on single-TC v5e/v6e).
        bt_budget = min(bt_budget, max(1, B // 2))
        bt = 1
        for d in range(1, B + 1):
            if B % d == 0 and d <= bt_budget:
                bt = d
    assert B % bt == 0, "bt must divide B"
    return tt, bt


def criterion_loss(decoder_logits, labels, lengths, *, tt=None, bt=None, bf16_compute=False):
    """decoder_logits: (B, T, V) f32/bf16; labels: (B, T+1) int; lengths: (B,) int.

    bf16-in-HBM is recommended on v5e (memory-bound); the kernel keeps exp-sum/log in f32.
    bf16_compute additionally keeps the big subtract in bf16 (VALU saver on v6e/v7x).
    """
    B, T, V = decoder_logits.shape
    itemsize = jnp.dtype(decoder_logits.dtype).itemsize
    vmem_limit = int(_tpu_vmem_limit_bytes())
    tt, bt = _choose_tiles(B, T, V, itemsize, vmem_limit, tt=tt, bt=bt)
    nb = B // bt
    nt = pl.cdiv(T, tt)

    bf16_compute = bool(bf16_compute) and decoder_logits.dtype == jnp.bfloat16

    lengths = lengths.astype(jnp.int32)
    shifted = labels[:, 1:T + 1].astype(jnp.int32).reshape(B, T, 1)
    nvalid = jnp.maximum(lengths - 1, 0)
    nvalid_in = nvalid.reshape(B, 1, 1)

    # Per-batch-block number of T-tiles that actually contain valid tokens; used both to
    # clamp the index_map (padded-tail DMAs dedupe) and to gate compute in-kernel.
    tiles_needed = ((jnp.max(nvalid.reshape(nb, bt), axis=1) + tt - 1) // tt).astype(jnp.int32)

    def _t_clamped(t, bb, tiles_ref):
        return jnp.minimum(t, jnp.maximum(tiles_ref[bb] - 1, 0))

    kernel = functools.partial(_criterion_kernel, bf16_compute=bf16_compute)

    rowsums = pl.pallas_call(
        kernel,
        out_shape=jax.ShapeDtypeStruct((B, 1, 1), jnp.float32),
        grid_spec=pltpu.PrefetchScalarGridSpec(
            num_scalar_prefetch=1,
            grid=(nb, nt),
            in_specs=[
                pl.BlockSpec((bt, 1, 1), lambda bb, t, tiles: (bb, 0, 0)),                          # nvalid
                pl.BlockSpec((bt, tt, 1), lambda bb, t, tiles: (bb, _t_clamped(t, bb, tiles), 0)),  # labels
                pl.BlockSpec((bt, tt, V), lambda bb, t, tiles: (bb, _t_clamped(t, bb, tiles), 0)),  # logits
            ],
            out_specs=pl.BlockSpec((bt, 1, 1), lambda bb, t, tiles: (bb, 0, 0)),
        ),
        compiler_params=pltpu.CompilerParams(
            dimension_semantics=("parallel", "arbitrary"),
            vmem_limit_bytes=vmem_limit,
        ),
    )(tiles_needed, nvalid_in, shifted, decoder_logits)

    # Final mean-of-means in the wrapper (matches reference accumulation order).
    row_sums = rowsums[:, 0, 0]
    # lengths == 1 rows contribute 0 (the PyTorch reference is degenerate — mean over zero tokens — there).
    denom = jnp.maximum(lengths - 1, 1).astype(jnp.float32)
    return jnp.mean(row_sums / denom)


def _reference_loss(logits, labels, lengths):
    """Pure-JAX mirror of the PyTorch forward()."""
    B = logits.shape[0]
    total = 0.0
    for i in range(B):
        n = int(lengths[i]) - 1
        lg = logits[i, :n]
        tg = labels[i, 1:n + 1]
        logp = jax.nn.log_softmax(lg, axis=-1)
        total += -jnp.mean(logp[jnp.arange(n), tg])
    return total / B


if __name__ == "__main__":
    key = jax.random.PRNGKey(0)
    B, T, V = 4, 24, 256          # batch, decode steps, vocab size
    k1, k2 = jax.random.split(key)

    decoder_logits = jax.random.normal(k1, (B, T, V), dtype=jnp.float32)
    labels = jax.random.randint(k2, (B, T + 1), 0, V, dtype=jnp.int32)
    lengths = jnp.array([9, 25, 2, 17], dtype=jnp.int32)   # each in [2, T+1]; mixed padding

    ref = _reference_loss(decoder_logits, labels, lengths)

    # Auto-tiled path (bt capped at B//2 so the parallel axis has >= 2 blocks).
    loss = jax.block_until_ready(criterion_loss(decoder_logits, labels, lengths))
    assert jnp.allclose(loss, ref, atol=1e-5, rtol=1e-5), (float(loss), float(ref))

    # Forced small tiles: exercises T-tiling, batch blocking and length-aware DMA clamping.
    loss_tiled = jax.block_until_ready(criterion_loss(decoder_logits, labels, lengths, tt=8, bt=2))
    assert jnp.allclose(loss_tiled, ref, atol=1e-5, rtol=1e-5), (float(loss_tiled), float(ref))

    # bf16 logits in HBM (halved bandwidth, recommended default on v5e); f32 compute in-kernel.
    logits_bf16 = decoder_logits.astype(jnp.bfloat16)
    ref_bf16 = _reference_loss(logits_bf16.astype(jnp.float32), labels, lengths)
    loss_bf16 = jax.block_until_ready(criterion_loss(logits_bf16, labels, lengths, tt=8, bt=2))
    assert jnp.allclose(loss_bf16, ref_bf16, atol=1e-4, rtol=1e-4), (float(loss_bf16), float(ref_bf16))

    # bf16 compute path (v6e/v7x VALU saver): big subtract stays bf16; exp-sum/log stay f32.
    loss_bf16c = jax.block_until_ready(
        criterion_loss(logits_bf16, labels, lengths, bf16_compute=True))
    assert jnp.allclose(loss_bf16c, ref_bf16, atol=5e-2, rtol=1e-2), (float(loss_bf16c), float(ref_bf16))

    print("KERNEL_OK")
</pallas_src>

<mosaic_0001>
module attributes {stable_mosaic.version = 11 : i64} {
  func.func @_criterion_kernel(%arg0: i32, %arg1: i32, %arg2: memref<2xi32, #tpu.memory_space<smem>>, %arg3: memref<2x1x1xi32, #tpu.memory_space<vmem>>, %arg4: memref<2x24x1xi32, #tpu.memory_space<vmem>>, %arg5: memref<2x24x256xf32, #tpu.memory_space<vmem>>, %arg6: memref<2x1x1xf32, #tpu.memory_space<vmem>>) attributes {dimension_semantics = [#tpu.dimension_semantics<parallel>, #tpu.dimension_semantics<arbitrary>], iteration_bounds = array<i64: 2, 1>, scalar_prefetch = 1 : i64, scratch_operands = 0 : i64, tpu.core_type = #tpu.core_type<tc>, window_params = [{transform_indices = @transform_0, window_bounds = array<i64: 2, 1, 1>}, {transform_indices = @transform_1, window_bounds = array<i64: 2, 24, 1>}, {transform_indices = @transform_2, window_bounds = array<i64: 2, 24, 256>}, {transform_indices = @transform_3, window_bounds = array<i64: 2, 1, 1>}]} {
    %c0_i32 = arith.constant 0 : i32
    %0 = arith.cmpi eq, %arg1, %c0_i32 : i32
    %1 = arith.extui %0 : i1 to i32
    %c0_i32_0 = arith.constant 0 : i32
    %2 = arith.cmpi ne, %1, %c0_i32_0 : i32
    scf.if %2 {
      %cst = arith.constant 0.000000e+00 : f32
      %8 = vector.broadcast %cst : f32 to vector<2x1x1xf32>
      %c0 = arith.constant 0 : index
      %c0_2 = arith.constant 0 : index
      %c0_3 = arith.constant 0 : index
      %9 = vector.load %arg6[%c0, %c0_2, %c0_3] : memref<2x1x1xf32, #tpu.memory_space<vmem>>, vector<2x1x1xf32>
      tpu.vector_store %arg6[%c0, %c0_2, %c0_3], %8 {strides = array<i32>} : memref<2x1x1xf32, #tpu.memory_space<vmem>>, vector<2x1x1xf32>,
    } else {
    }
    %3 = arith.index_cast %arg0 : i32 to index
    %4 = memref.load %arg2[%3] : memref<2xi32, #tpu.memory_space<smem>>
    %5 = arith.cmpi slt, %arg1, %4 : i32
    %6 = arith.extui %5 : i1 to i32
    %c0_i32_1 = arith.constant 0 : i32
    %7 = arith.cmpi ne, %6, %c0_i32_1 : i32
    scf.if %7 {
      %c0 = arith.constant 0 : index
      %c0_2 = arith.constant 0 : index
      %c0_3 = arith.constant 0 : index
      %8 = vector.load %arg5[%c0, %c0_2, %c0_3] : memref<2x24x256xf32, #tpu.memory_space<vmem>>, vector<2x24x256xf32>
      %c0_4 = arith.constant 0 : index
      %c0_5 = arith.constant 0 : index
      %c0_6 = arith.constant 0 : index
      %9 = vector.load %arg4[%c0_4, %c0_5, %c0_6] : memref<2x24x1xi32, #tpu.memory_space<vmem>>, vector<2x24x1xi32>
      %cst = arith.constant dense<0xFF800000> : vector<2x24xf32>
      %10 = vector.multi_reduction <maximumf>, %8, %cst [2] : vector<2x24x256xf32> to vector<2x24xf32>
      %11 = vector.shape_cast %10 : vector<2x24xf32> to vector<2x24x1xf32>
      %12 = tpu.iota {dimensions = array<i32: 2>} : vector<1x1x256xi32>
      %13 = vector.broadcast %12 : vector<1x1x256xi32> to vector<2x24x256xi32>
      %14 = vector.broadcast %9 : vector<2x24x1xi32> to vector<2x24x256xi32>
      %15 = arith.cmpi eq, %13, %14 : vector<2x24x256xi32>
      %c0_i32_7 = arith.constant 0 : i32
      %16 = arith.sitofp %c0_i32_7 : i32 to f32
      %17 = vector.broadcast %16 : f32 to vector<2x24x256xf32>
      %18 = arith.select %15, %8, %17 : vector<2x24x256xi1>, vector<2x24x256xf32>
      %cst_8 = arith.constant dense<0.000000e+00> : vector<2x24xf32>
      %19 = vector.multi_reduction <add>, %18, %cst_8 [2] : vector<2x24x256xf32> to vector<2x24xf32>
      %20 = vector.shape_cast %19 : vector<2x24xf32> to vector<2x24x1xf32>
      %21 = vector.broadcast %11 : vector<2x24x1xf32> to vector<2x24x256xf32>
      %22 = arith.subf %8, %21 : vector<2x24x256xf32>
      %23 = math.exp %22 : vector<2x24x256xf32>
      %cst_9 = arith.constant dense<0.000000e+00> : vector<2x24xf32>
      %24 = vector.multi_reduction <add>, %23, %cst_9 [2] : vector<2x24x256xf32> to vector<2x24xf32>
      %25 = vector.shape_cast %24 : vector<2x24xf32> to vector<2x24x1xf32>
      %26 = math.log %25 : vector<2x24x1xf32>
      %27 = arith.addf %11, %26 : vector<2x24x1xf32>
      %28 = arith.subf %27, %20 : vector<2x24x1xf32>
      %29 = tpu.iota {dimensions = array<i32: 1>} : vector<1x24x1xi32>
      %c24_i32 = arith.constant 24 : i32
      %30 = arith.muli %arg1, %c24_i32 : i32
      %31 = vector.broadcast %30 : i32 to vector<1x24x1xi32>
      %32 = arith.addi %29, %31 : vector<1x24x1xi32>
      %c0_10 = arith.constant 0 : index
      %c0_11 = arith.constant 0 : index
      %c0_12 = arith.constant 0 : index
      %33 = vector.load %arg3[%c0_10, %c0_11, %c0_12] : memref<2x1x1xi32, #tpu.memory_space<vmem>>, vector<2x1x1xi32>
      %34 = vector.broadcast %32 : vector<1x24x1xi32> to vector<2x24x1xi32>
      %35 = vector.broadcast %33 : vector<2x1x1xi32> to vector<2x24x1xi32>
      %36 = arith.cmpi slt, %34, %35 : vector<2x24x1xi32>
      %c0_13 = arith.constant 0 : index
      %c0_14 = arith.constant 0 : index
      %c0_15 = arith.constant 0 : index
      %37 = vector.load %arg6[%c0_13, %c0_14, %c0_15] : memref<2x1x1xf32, #tpu.memory_space<vmem>>, vector<2x1x1xf32>
      %cst_16 = arith.constant 0.000000e+00 : f32
      %38 = vector.broadcast %cst_16 : f32 to vector<2x24x1xf32>
      %39 = arith.select %36, %28, %38 : vector<2x24x1xi1>, vector<2x24x1xf32>
      %cst_17 = arith.constant dense<0.000000e+00> : vector<2x1xf32>
      %40 = vector.multi_reduction <add>, %39, %cst_17 [1] : vector<2x24x1xf32> to vector<2x1xf32>
      %41 = vector.shape_cast %40 : vector<2x1xf32> to vector<2x1x1xf32>
      %42 = arith.addf %37, %41 : vector<2x1x1xf32>
      %c0_18 = arith.constant 0 : index
      %c0_19 = arith.constant 0 : index
      %c0_20 = arith.constant 0 : index
      %43 = vector.load %arg6[%c0_18, %c0_19, %c0_20] : memref<2x1x1xf32, #tpu.memory_space<vmem>>, vector<2x1x1xf32>
      tpu.vector_store %arg6[%c0_18, %c0_19, %c0_20], %42 {strides = array<i32>} : memref<2x1x1xf32, #tpu.memory_space<vmem>>, vector<2x1x1xf32>,
    } else {
    }
    return
  }
  func.func @transform_0(%arg0: i32, %arg1: i32, %arg2: memref<2xi32, #tpu.memory_space<smem>>) -> (i32, i32, i32) {
    %c0_i32 = arith.constant 0 : i32
    %c0_i32_0 = arith.constant 0 : i32
    %c0_i32_1 = arith.constant 0 : i32
    return %arg0, %c0_i32, %c0_i32_0 : i32, i32, i32
  }
  func.func @transform_1(%arg0: i32, %arg1: i32, %arg2: memref<2xi32, #tpu.memory_space<smem>>) -> (i32, i32, i32) {
    %0 = arith.index_cast %arg0 : i32 to index
    %1 = memref.load %arg2[%0] : memref<2xi32, #tpu.memory_space<smem>>
    %c1_i32 = arith.constant 1 : i32
    %2 = arith.subi %1, %c1_i32 : i32
    %c0_i32 = arith.constant 0 : i32
    %3 = arith.maxsi %2, %c0_i32 : i32
    %4 = arith.minsi %arg1, %3 : i32
    %c0_i32_0 = arith.constant 0 : i32
    %c0_i32_1 = arith.constant 0 : i32
    return %arg0, %4, %c0_i32_0 : i32, i32, i32
  }
  func.func @transform_2(%arg0: i32, %arg1: i32, %arg2: memref<2xi32, #tpu.memory_space<smem>>) -> (i32, i32, i32) {
    %0 = arith.index_cast %arg0 : i32 to index
    %1 = memref.load %arg2[%0] : memref<2xi32, #tpu.memory_space<smem>>
    %c1_i32 = arith.constant 1 : i32
    %2 = arith.subi %1, %c1_i32 : i32
    %c0_i32 = arith.constant 0 : i32
    %3 = arith.maxsi %2, %c0_i32 : i32
    %4 = arith.minsi %arg1, %3 : i32
    %c0_i32_0 = arith.constant 0 : i32
    %c0_i32_1 = arith.constant 0 : i32
    return %arg0, %4, %c0_i32_0 : i32, i32, i32
  }
  func.func @transform_3(%arg0: i32, %arg1: i32, %arg2: memref<2xi32, #tpu.memory_space<smem>>) -> (i32, i32, i32) {
    %c0_i32 = arith.constant 0 : i32
    %c0_i32_0 = arith.constant 0 : i32
    %c0_i32_1 = arith.constant 0 : i32
    return %arg0, %c0_i32, %c0_i32_0 : i32, i32, i32
  }
}

</mosaic_0001>

<llo_original>
// kernel: tpu_custom_call.1
$region0: #{tpu_custom_call.1}
  #allocation0 [shape = 'u32[]', space=smem, size = 0x4, offset = 0x4, fixed_abs, tag = 'smem constant byte address 0x4 - core index']
  #allocation1 [shape = 'u32[144,128]{1,0:T(1,128)}', space=vmem, size = 0x12000, scoped, tag = 'internal scratch']
  #allocation2 [shape = 's32[1]{0}', space=sflag, size = 0x4, scoped, tag = 'scoped memory for tpu_custom_call.1']
  #allocation3 [shape = 'u8[512]{0}', space=smem, size = 0x200, scoped, tag = 'prefetched SMEM operand 0']
  %s0 = inlined_call_operand.vmem [shape: s32[2], index: 0, kind: input, shape index: {}]
  %s1 = inlined_call_operand.vmem [shape: s32[4,1,1], index: 1, kind: input, shape index: {}]
  %s2 = inlined_call_operand.vmem [shape: s32[4,24,1], index: 2, kind: input, shape index: {}]
  %s3 = inlined_call_operand.hbm [shape: f32[4,24,256], index: 3, kind: input, shape index: {}]
  %s4 = inlined_call_operand.vmem [shape: f32[4,1,1], index: 4, kind: output, shape index: {}]
  %s5 = sld [smem:[#allocation0]]
  $region57: #{tpu_custom_call.1} parent=0
    _
  %s7 = ssub.s32 1, %s5
  %s8 = scalar_select 0, %s7, %s5
  %s9 = sshll.u32 %s0, 4
  %s10 = int_to_ptr.vmem [resolvable:$true] %s9
  %12 = dma.vmem_to_smem %s10, 16, [#allocation3], [#allocation2]
  %13 = dma.done [#allocation2], 16
  %14 = sfence
  $region1: #{tpu_custom_call.1} parent=0
    #allocation4 [shape = 'u8[98304]{0}', space=vmem, size = 0x18000, scoped, tag = 'input window, operand 3']
    #allocation5 [shape = 's32[2]{0}', space=sflag, size = 0x8, scoped, tag = 'scoped memory for tpu_custom_call.1']
    %15 = vsyncpa [#allocation5], 0
    %s16 = scalar_lea.sflag [#allocation5], 1
    %17 = vsyncpa %s16, 0
    loop: start=0, step=1, limit=4
    $region2: #{tpu_custom_call.1} parent=1 // loop_pre_header
      _
    $region3: #{tpu_custom_call.1} parent=1 // loop_header
      %s19 = sphi 0, %s23
      %p20 = scmp.ge.s32.totalorder %s19, 4
      %s26 = sphi 0, %s38
      %s27 = sphi 0, %s34
      %s28 = sphi 0, %s26
      %s29 = sphi 0, %s27
      %s30 = sphi 0, %s28
      %s31 = sphi 0, %s29
      %s41 = sphi 0, %s43
      %s44 = sphi 0, %s41
      %s45 = sphi 0, %s44
      %s61 = sphi 0, %s45
      %s81 = sphi 0, %s83
      %s84 = sphi 0, %s81
      %s85 = sphi 0, %s84
      %s101 = sphi 0, %s85
      %s121 = sphi 0, %s123
      %s124 = sphi 0, %s121
      %s125 = sphi 0, %s124
      %s141 = sphi 0, %s125
      %s147 = sphi 0, %s149
      %s150 = sphi 0, %s147
      %s151 = sphi 0, %s150
      %s167 = sphi 0, %s151
    $region4: #{tpu_custom_call.1} parent=1 // loop_header_branch
      %22 = sbr.rel (%p20) target = $region8
    $region5: #{tpu_custom_call.1} parent=1 // loop_body
      %s24 = ssub.s32 %s19, 1
      %s25 = ssub.s32 %s19, 2
      %s32 = sadd.s32 1, %s27
      %p33 = scmp.ge.s32.totalorder %s32, 1
      %s34 = scalar_select %p33, 0, %s32
      %s35 = sadd.s32 1, %s26
      %s36 = scalar_select %p33, %s35, %s26
      %p37 = scmp.ge.s32.totalorder %s36, 2
      %s38 = scalar_select %p37, 0, %s36
      %s39 = ssub.s32 %s26, %s38
      %p40 = scmp.eq.s32.totalorder %s39, 0
      %s42 = sadd.s32 %s41, 1
      %s43 = scalar_select %p40, %s41, %s42
      %p46 = pneg %p40
      %p47 = scmp.eq.s32.totalorder %s19, 1
      %p48 = por %p46, %p47
      %p49 = scmp.ne.s32.totalorder %s41, %s44
      %p50 = scmp.eq.s32.totalorder %s19, 0
      %p51 = por %p49, %p50
      %p52 = scmp.ne.s32.totalorder %s41, %s44
      %p53 = scmp.eq.s32.totalorder %s24, 1
      %p54 = por %p52, %p53
      %p55 = scmp.ne.s32.totalorder %s44, %s45
      %p56 = scmp.eq.s32.totalorder %s24, 0
      %p57 = por %p55, %p56
      %p58 = scmp.ne.s32.totalorder %s44, %s45
      %p59 = scmp.eq.s32.totalorder %s25, 1
      %p60 = por %p58, %p59
      %p62 = scmp.ne.s32.totalorder %s45, %s61
      %p63 = scmp.eq.s32.totalorder %s25, 0
      %p64 = por %p62, %p63
      %s65 = sld [smem:[#allocation3 + %s26]]
      %s66 = ssub.s32 %s65, 1
      %p67 = scmp.gt.s32.totalorder %s66, 0
      %s68 = scalar_select %p67, %s66, 0
      %p69 = scmp.lt.s32.totalorder %s27, %s68
      %s70 = scalar_select %p69, %s27, %s68
      %s71 = sld [smem:[#allocation3 + %s38]]
      %s72 = ssub.s32 %s71, 1
      %p73 = scmp.gt.s32.totalorder %s72, 0
      %s74 = scalar_select %p73, %s72, 0
      %p75 = scmp.lt.s32.totalorder %s34, %s74
      %s76 = scalar_select %p75, %s34, %s74
      %s77 = ssub.s32 %s26, %s38
      %s78 = ssub.s32 %s70, %s76
      %s79 = sor.u32 %s77, %s78
      %p80 = scmp.eq.s32.totalorder %s79, 0
      %s82 = sadd.s32 %s81, 1
      %s83 = scalar_select %p80, %s81, %s82
      %p86 = pneg %p80
      %p87 = scmp.eq.s32.totalorder %s19, 1
      %p88 = por %p86, %p87
      %p89 = scmp.ne.s32.totalorder %s81, %s84
      %p90 = scmp.eq.s32.totalorder %s19, 0
      %p91 = por %p89, %p90
      %p92 = scmp.ne.s32.totalorder %s81, %s84
      %p93 = scmp.eq.s32.totalorder %s24, 1
      %p94 = por %p92, %p93
      %p95 = scmp.ne.s32.totalorder %s84, %s85
      %p96 = scmp.eq.s32.totalorder %s24, 0
      %p97 = por %p95, %p96
      %p98 = scmp.ne.s32.totalorder %s84, %s85
      %p99 = scmp.eq.s32.totalorder %s25, 1
      %p100 = por %p98, %p99
      %p102 = scmp.ne.s32.totalorder %s85, %s101
      %p103 = scmp.eq.s32.totalorder %s25, 0
      %p104 = por %p102, %p103
      %s105 = sld [smem:[#allocation3 + %s26]]
      %s106 = ssub.s32 %s105, 1
      %p107 = scmp.gt.s32.totalorder %s106, 0
      %s108 = scalar_select %p107, %s106, 0
      %p109 = scmp.lt.s32.totalorder %s27, %s108
      %s110 = scalar_select %p109, %s27, %s108
      %s111 = sld [smem:[#allocation3 + %s38]]
      %s112 = ssub.s32 %s111, 1
      %p113 = scmp.gt.s32.totalorder %s112, 0
      %s114 = scalar_select %p113, %s112, 0
      %p115 = scmp.lt.s32.totalorder %s34, %s114
      %s116 = scalar_select %p115, %s34, %s114
      %s117 = ssub.s32 %s26, %s38
      %s118 = ssub.s32 %s110, %s116
      %s119 = sor.u32 %s117, %s118
      %p120 = scmp.eq.s32.totalorder %s119, 0
      %s122 = sadd.s32 %s121, 1
      %s123 = scalar_select %p120, %s121, %s122
      %p126 = pneg %p120
      %p127 = scmp.eq.s32.totalorder %s19, 1
      %p128 = por %p126, %p127
      %p129 = scmp.ne.s32.totalorder %s121, %s124
      %p130 = scmp.eq.s32.totalorder %s19, 0
      %p131 = por %p129, %p130
      %p132 = scmp.ne.s32.totalorder %s121, %s124
      %p133 = scmp.eq.s32.totalorder %s24, 1
      %p134 = por %p132, %p133
      %p135 = scmp.ne.s32.totalorder %s124, %s125
      %p136 = scmp.eq.s32.totalorder %s24, 0
      %p137 = por %p135, %p136
      %p138 = scmp.ne.s32.totalorder %s124, %s125
      %p139 = scmp.eq.s32.totalorder %s25, 1
      %p140 = por %p138, %p139
      %p142 = scmp.ne.s32.totalorder %s125, %s141
      %p143 = scmp.eq.s32.totalorder %s25, 0
      %p144 = por %p142, %p143
      %s145 = ssub.s32 %s26, %s38
      %p146 = scmp.eq.s32.totalorder %s145, 0
      %s148 = sadd.s32 %s147, 1
      %s149 = scalar_select %p146, %s147, %s148
      %p152 = pneg %p146
      %p153 = scmp.eq.s32.totalorder %s19, 1
      %p154 = por %p152, %p153
      %p155 = scmp.ne.s32.totalorder %s147, %s150
      %p156 = scmp.eq.s32.totalorder %s19, 0
      %p157 = por %p155, %p156
      %p158 = scmp.ne.s32.totalorder %s147, %s150
      %p159 = scmp.eq.s32.totalorder %s24, 1
      %p160 = por %p158, %p159
      %p161 = scmp.ne.s32.totalorder %s150, %s151
      %p162 = scmp.eq.s32.totalorder %s24, 0
      %p163 = por %p161, %p162
      %p164 = scmp.ne.s32.totalorder %s150, %s151
      %p165 = scmp.eq.s32.totalorder %s25, 1
      %p166 = por %p164, %p165
      %p168 = scmp.ne.s32.totalorder %s151, %s167
      %p169 = scmp.eq.s32.totalorder %s25, 0
      %p170 = por %p168, %p169
      %p171 = scmp.le.s32.totalorder 1, %s19
      %p172 = scmp.lt.s32.totalorder %s19, 3
      %p173 = pnand %p171, %p172
      %p174 = pneg %p173
      // Predicated region
      $region9: #{tpu_custom_call.1} parent=5 // pred_check
        _
      $region10: #{tpu_custom_call.1} parent=5 // pred_check_branch
        %176 = sbr.rel (%p173) target = $region12
      $region11: #{tpu_custom_call.1} parent=5 // pred_region
        %s177 = ssub.s32 %s19, 1
      $region12: #{tpu_custom_call.1} parent=5 // pred_fallthru
        _
      %p178 = scmp.lt.s32.totalorder %s19, 2
      // Predicated region
      $region13: #{tpu_custom_call.1} parent=5 // pred_check
        %p179 = pneg %p178
      $region14: #{tpu_custom_call.1} parent=5 // pred_check_branch
        %181 = sbr.rel (%p179) target = $region16
      $region15: #{tpu_custom_call.1} parent=5 // pred_region
        // Predicated region
        $region17: #{tpu_custom_call.1} parent=15 // pred_check
          %p182 = pneg %p51
        $region18: #{tpu_custom_call.1} parent=15 // pred_check_branch
          %184 = sbr.rel (%p182) target = $region20
        $region19: #{tpu_custom_call.1} parent=15 // pred_region
          %s185 = smul.u32 2, %s26
          %p186 = scmp.lt.s32.totalorder %s185, 3
          %s187 = scalar_select %p186, %s185, 3
          %s188 = scalar_lea.vmem %s1, %s187
          %s189 = smul.u32 2, %s26
        $region20: #{tpu_custom_call.1} parent=15 // pred_fallthru
          _
        // Predicated region
        $region21: #{tpu_custom_call.1} parent=15 // pred_check
          %p190 = pneg %p91
        $region22: #{tpu_custom_call.1} parent=15 // pred_check_branch
          %192 = sbr.rel (%p190) target = $region24
        $region23: #{tpu_custom_call.1} parent=15 // pred_region
          %s193 = sld [smem:[#allocation3 + %s26]]
          %s194 = ssub.s32 %s193, 1
          %p195 = scmp.gt.s32.totalorder %s194, 0
          %s196 = scalar_select %p195, %s194, 0
          %p197 = scmp.lt.s32.totalorder %s27, %s196
          %s198 = scalar_select %p197, %s27, %s196
          %s199 = smul.u32 2, %s26
          %s200 = smul.u32 3, %s198
          %p201 = scmp.lt.s32.totalorder %s199, 3
          %s202 = scalar_select %p201, %s199, 3
          %p203 = scmp.lt.s32.totalorder %s200, 2
          %s204 = scalar_select %p203, %s200, 2
          %s205 = smul.addr %s202, 3
          %s206 = sadd.s32 %s204, %s205
          %s207 = smul.addr %s206, 8
          %s208 = scalar_lea.vmem %s2, %s207
          %s209 = sld [smem:[#allocation3 + %s26]]
          %s210 = ssub.s32 %s209, 1
          %p211 = scmp.gt.s32.totalorder %s210, 0
          %s212 = scalar_select %p211, %s210, 0
          %p213 = scmp.lt.s32.totalorder %s27, %s212
          %s214 = scalar_select %p213, %s27, %s212
          %s215 = smul.u32 2, %s26
          %s216 = smul.u32 3, %s214
        $region24: #{tpu_custom_call.1} parent=15 // pred_fallthru
          _
        // Predicated region
        $region25: #{tpu_custom_call.1} parent=15 // pred_check
          %p217 = pneg %p131
        $region26: #{tpu_custom_call.1} parent=15 // pred_check_branch
          %219 = sbr.rel (%p217) target = $region28
        $region27: #{tpu_custom_call.1} parent=15 // pred_region
          %s220 = sand.u32 %s121, 1
          %s221 = scalar_lea.sflag [#allocation5], %s220
          %s222 = sand.u32 %s121, 1
          %s223 = smul.addr %s222, 96
          %s224 = scalar_lea.vmem [#allocation4], %s223
          %s225 = sld [smem:[#allocation3 + %s26]]
          %s226 = ssub.s32 %s225, 1
          %p227 = scmp.gt.s32.totalorder %s226, 0
          %s228 = scalar_select %p227, %s226, 0
          %p229 = scmp.lt.s32.totalorder %s27, %s228
          %s230 = scalar_select %p229, %s27, %s228
          %s231 = smul.u32 2, %s26
          %s232 = smul.u32 3, %s230
          %s234 = ssub.s32 1536, 1536
          %235 = vsyncadd %s221, %s234
          %s236 = smul.addr %s232, 2
          %s237 = smul.addr %s231, 6
          %s238 = sadd.s32 %s236, %s237
          %s239 = smul.addr %s238, 128
          %s240 = scalar_lea.hbm %s3, %s239
          %s241 = sshll.u32 %s224, 4
          %s242 = int_to_ptr.vmem [resolvable:$true] %s241
          %247 = dma.hbm_to_vmem [thread:$0]  %s240, 1536, %s242, %s221, 256, 256, 16
        $region28: #{tpu_custom_call.1} parent=15 // pred_fallthru
          _
      $region16: #{tpu_custom_call.1} parent=5 // pred_fallthru
        _
      %p248 = scmp.le.s32.totalorder 1, %s19
      %p249 = scmp.lt.s32.totalorder %s19, 3
      %p250 = pnand %p248, %p249
      %p251 = pneg %p250
      // Predicated region
      $region29: #{tpu_custom_call.1} parent=5 // pred_check
        _
      $region30: #{tpu_custom_call.1} parent=5 // pred_check_branch
        %253 = sbr.rel (%p250) target = $region32
      $region31: #{tpu_custom_call.1} parent=5 // pred_region
        %s254 = ssub.s32 %s19, 1
        %s255 = sand.u32 %s124, 1
        %s256 = scalar_lea.sflag [#allocation5], %s255
        %s257 = sand.u32 %s124, 1
        %s258 = smul.addr %s257, 96
        %s259 = scalar_lea.vmem [#allocation4], %s258
        // Predicated region
        $region33: #{tpu_custom_call.1} parent=31 // pred_check
          %p260 = pneg %p137
        $region34: #{tpu_custom_call.1} parent=31 // pred_check_branch
          %262 = sbr.rel (%p260) target = $region36
        $region35: #{tpu_custom_call.1} parent=31 // pred_region
          %263 = dma.done %s256, 1536
        $region36: #{tpu_custom_call.1} parent=31 // pred_fallthru
          _
        %s264 = smul.u32 2, %s28
        %p265 = scmp.lt.s32.totalorder %s264, 3
        %s266 = scalar_select %p265, %s264, 3
        %s267 = scalar_lea.vmem %s1, %s266
        %p268 = pneg %p57
        %p269 = pneg %p54
        %s270 = sld [smem:[#allocation3 + %s28]]
        %s271 = ssub.s32 %s270, 1
        %p272 = scmp.gt.s32.totalorder %s271, 0
        %s273 = scalar_select %p272, %s271, 0
        %p274 = scmp.lt.s32.totalorder %s29, %s273
        %s275 = scalar_select %p274, %s29, %s273
        %s276 = smul.u32 2, %s28
        %s277 = smul.u32 3, %s275
        %p278 = scmp.lt.s32.totalorder %s276, 3
        %s279 = scalar_select %p278, %s276, 3
        %p280 = scmp.lt.s32.totalorder %s277, 2
        %s281 = scalar_select %p280, %s277, 2
        %s282 = smul.addr %s279, 3
        %s283 = sadd.s32 %s281, %s282
        %s284 = smul.addr %s283, 8
        %s285 = scalar_lea.vmem %s2, %s284
        %p286 = pneg %p97
        %p287 = pneg %p94
        %s288 = sand.u32 %s124, 1
        %s289 = scalar_lea.sflag [#allocation5], %s288
        %s290 = sand.u32 %s124, 1
        %s291 = smul.addr %s290, 96
        %s292 = scalar_lea.vmem [#allocation4], %s291
        %p293 = pneg %p137
        %p294 = pneg %p134
        %p295 = pneg %p163
        %p296 = pneg %p160
        %s297 = smul.u32 2, %s28
        %p298 = scmp.lt.s32.totalorder %s297, 3
        %s299 = scalar_select %p298, %s297, 3
        %s300 = scalar_lea.vmem %s4, %s299
        %s301 = smul.u32 2, %s28
        %p302 = scmp.lt.s32.totalorder %s301, 3
        %s303 = scalar_select %p302, %s301, 3
        %s304 = scalar_lea.vmem %s1, %s303
        %s305 = smul.u32 2, %s28
        %s306 = sld [smem:[#allocation3 + %s28]]
        %s307 = ssub.s32 %s306, 1
        %p308 = scmp.gt.s32.totalorder %s307, 0
        %s309 = scalar_select %p308, %s307, 0
        %p310 = scmp.lt.s32.totalorder %s29, %s309
        %s311 = scalar_select %p310, %s29, %s309
        %s312 = smul.u32 2, %s28
        %s313 = smul.u32 3, %s311
        %p314 = scmp.lt.s32.totalorder %s312, 3
        %s315 = scalar_select %p314, %s312, 3
        %p316 = scmp.lt.s32.totalorder %s313, 2
        %s317 = scalar_select %p316, %s313, 2
        %s318 = smul.addr %s315, 3
        %s319 = sadd.s32 %s317, %s318
        %s320 = smul.addr %s319, 8
        %s321 = scalar_lea.vmem %s2, %s320
        %s322 = sld [smem:[#allocation3 + %s28]]
        %s323 = ssub.s32 %s322, 1
        %p324 = scmp.gt.s32.totalorder %s323, 0
        %s325 = scalar_select %p324, %s323, 0
        %p326 = scmp.lt.s32.totalorder %s29, %s325
        %s327 = scalar_select %p326, %s29, %s325
        %s328 = smul.u32 2, %s28
        %s329 = smul.u32 3, %s327
        %s330 = sld [smem:[#allocation3 + %s28]]
        %s331 = ssub.s32 %s330, 1
        %p332 = scmp.gt.s32.totalorder %s331, 0
        %s333 = scalar_select %p332, %s331, 0
        %p334 = scmp.lt.s32.totalorder %s29, %s333
        %s335 = scalar_select %p334, %s29, %s333
        %s336 = smul.u32 2, %s28
        %s337 = smul.u32 3, %s335
        %s338 = smul.u32 2, %s28
        %p339 = scmp.lt.s32.totalorder %s338, 3
        %s340 = scalar_select %p339, %s338, 3
        %s341 = scalar_lea.vmem %s4, %s340
        %s342 = smul.u32 2, %s28
        %p343 = scmp.eq.s32.totalorder %s29, 0
        // Predicated region
        $region37: #{tpu_custom_call.1} parent=31 // pred_check
          %p344 = pneg %p343
        $region38: #{tpu_custom_call.1} parent=31 // pred_check_branch
          %346 = sbr.rel (%p344) target = $region40
        $region39: #{tpu_custom_call.1} parent=31 // pred_region
          %vm347 = vcmask 0
          %348 = vst.msk [vmem:[%s341] sm:$0x1] %vm347, 0.0
          %349 = vst.msk [vmem:[%s341 + $0x1] sm:$0x1] %vm347, 0.0
        $region40: #{tpu_custom_call.1} parent=31 // pred_fallthru
          _
        %s350 = sld [smem:[#allocation3 + %s28]]
        %p351 = scmp.lt.s32.totalorder %s29, %s350
        // Predicated region
        $region41: #{tpu_custom_call.1} parent=31 // pred_check
          %p352 = pneg %p351
        $region42: #{tpu_custom_call.1} parent=31 // pred_check_branch
          %354 = sbr.rel (%p352) target = $region44
        $region43: #{tpu_custom_call.1} parent=31 // pred_region
          %v355 = vld [vmem:[%s259] sm:$0xff]
          %v356 = vld [vmem:[%s259 + $0x8] sm:$0xff]
          %v357 = vld [vmem:[%s259 + $0x10] sm:$0xff]
          %v358 = vld [vmem:[%s259 + $0x18] sm:$0xff]
          %v359 = vld [vmem:[%s259 + $0x20] sm:$0xff]
          %v360 = vld [vmem:[%s259 + $0x28] sm:$0xff]
          %v361 = vld [vmem:[%s259 + $0x30] sm:$0xff]
          %v362 = vld [vmem:[%s259 + $0x38] sm:$0xff]
          %v363 = vld [vmem:[%s259 + $0x40] sm:$0xff]
          %v364 = vld [vmem:[%s259 + $0x48] sm:$0xff]
          %v365 = vld [vmem:[%s259 + $0x50] sm:$0xff]
          %v366 = vld [vmem:[%s259 + $0x58] sm:$0xff]
          %v367 = vld [vmem:[%s321] sm:$0xff]
          %v368 = vld [vmem:[%s321 + $0x8] sm:$0xff]
          %v369 = vld [vmem:[%s321 + $0x10] sm:$0xff]
          %v370 = vld [vmem:[%s321 + $0x18] sm:$0xff]
          %v371 = vld [vmem:[%s321 + $0x20] sm:$0xff]
          %v372 = vld [vmem:[%s321 + $0x28] sm:$0xff]
          %v373 = vmax.f32 %v355, %v356
          %374 = vmax.xlane.f32.xlu0 %v373
          %v375 = vpop.xlane.xlu0 %374
          %v376 = vmax.f32 %v357, %v358
          %377 = vmax.xlane.f32.xlu0 %v376
          %v378 = vpop.xlane.xlu0 %377
          %v379 = vmax.f32 %v359, %v360
          %380 = vmax.xlane.f32.xlu0 %v379
          %v381 = vpop.xlane.xlu0 %380
          %v382 = vmax.f32 %v361, %v362
          %383 = vmax.xlane.f32.xlu0 %v382
          %v384 = vpop.xlane.xlu0 %383
          %v385 = vmax.f32 %v363, %v364
          %386 = vmax.xlane.f32.xlu0 %v385
          %v387 = vpop.xlane.xlu0 %386
          %v388 = vmax.f32 %v365, %v366
          %389 = vmax.xlane.f32.xlu0 %v388
          %v390 = vpop.xlane.xlu0 %389
          %v391 = vlaneseq
          %v392 = vand.u32 %v391, 127
          %v393 = vadd.s32 %v392, 128
          %394 = vset.pattern.permute.xlu0 0
          %395 = vperm.xlu0 %394, %v367
          %v396 = vpop.permute.xlu0 %395
          %397 = vset.pattern.permute.xlu0 0
          %398 = vperm.xlu0 %397, %v368
          %v399 = vpop.permute.xlu0 %398
          %400 = vset.pattern.permute.xlu0 0
          %401 = vperm.xlu0 %400, %v369
          %v402 = vpop.permute.xlu0 %401
          %403 = vset.pattern.permute.xlu0 0
          %404 = vperm.xlu0 %403, %v370
          %v405 = vpop.permute.xlu0 %404
          %406 = vset.pattern.permute.xlu0 0
          %407 = vperm.xlu0 %406, %v371
          %v408 = vpop.permute.xlu0 %407
          %409 = vset.pattern.permute.xlu0 0
          %410 = vperm.xlu0 %409, %v372
          %v411 = vpop.permute.xlu0 %410
          %vm412 = vcmp.eq.s32.totalorder %v392, %v396
          %vm413 = vcmp.eq.s32.totalorder %v393, %v396
          %vm414 = vcmp.eq.s32.totalorder %v392, %v399
          %vm415 = vcmp.eq.s32.totalorder %v393, %v399
          %vm416 = vcmp.eq.s32.totalorder %v392, %v402
          %vm417 = vcmp.eq.s32.totalorder %v393, %v402
          %vm418 = vcmp.eq.s32.totalorder %v392, %v405
          %vm419 = vcmp.eq.s32.totalorder %v393, %v405
          %vm420 = vcmp.eq.s32.totalorder %v392, %v408
          %vm421 = vcmp.eq.s32.totalorder %v393, %v408
          %vm422 = vcmp.eq.s32.totalorder %v392, %v411
          %vm423 = vcmp.eq.s32.totalorder %v393, %v411
          %v424 = vsel %vm412, %v355, 0.0
          %v425 = vsel %vm413, %v356, 0.0
          %v426 = vsel %vm414, %v357, 0.0
          %v427 = vsel %vm415, %v358, 0.0
          %v428 = vsel %vm416, %v359, 0.0
          %v429 = vsel %vm417, %v360, 0.0
          %v430 = vsel %vm418, %v361, 0.0
          %v431 = vsel %vm419, %v362, 0.0
          %v432 = vsel %vm420, %v363, 0.0
          %v433 = vsel %vm421, %v364, 0.0
          %v434 = vsel %vm422, %v365, 0.0
          %v435 = vsel %vm423, %v366, 0.0
          %v436 = vadd.f32 %v424, %v425
          %437 = vadd.xlane.f32.xlu0 %v436
          %v438 = vpop.xlane.xlu0 %437
          %v439 = vadd.f32 %v426, %v427
          %440 = vadd.xlane.f32.xlu0 %v439
          %v441 = vpop.xlane.xlu0 %440
          %v442 = vadd.f32 %v428, %v429
          %443 = vadd.xlane.f32.xlu0 %v442
          %v444 = vpop.xlane.xlu0 %443
          %v445 = vadd.f32 %v430, %v431
          %446 = vadd.xlane.f32.xlu0 %v445
          %v447 = vpop.xlane.xlu0 %446
          %v448 = vadd.f32 %v432, %v433
          %449 = vadd.xlane.f32.xlu0 %v448
          %v450 = vpop.xlane.xlu0 %449
          %v451 = vadd.f32 %v434, %v435
          %452 = vadd.xlane.f32.xlu0 %v451
          %v453 = vpop.xlane.xlu0 %452
          %v454 = vsub.f32 %v355, %v375
          %v455 = vsub.f32 %v356, %v375
          %v456 = vsub.f32 %v357, %v378
          %v457 = vsub.f32 %v358, %v378
          %v458 = vsub.f32 %v359, %v381
          %v459 = vsub.f32 %v360, %v381
          %v460 = vsub.f32 %v361, %v384
          %v461 = vsub.f32 %v362, %v384
          %v462 = vsub.f32 %v363, %v387
          %v463 = vsub.f32 %v364, %v387
          %v464 = vsub.f32 %v365, %v390
          %v465 = vsub.f32 %v366, %v390
          %v466 = vmul.f32 %v454, 1.442695
          %v467 = vpow.pop %v466
          %v468 = vmul.f32 %v455, 1.442695
          %v469 = vpow.pop %v468
          %v470 = vmul.f32 %v456, 1.442695
          %v471 = vpow.pop %v470
          %v472 = vmul.f32 %v457, 1.442695
          %v473 = vpow.pop %v472
          %v474 = vmul.f32 %v458, 1.442695
          %v475 = vpow.pop %v474
          %v476 = vmul.f32 %v459, 1.442695
          %v477 = vpow.pop %v476
          %v478 = vmul.f32 %v460, 1.442695
          %v479 = vpow.pop %v478
          %v480 = vmul.f32 %v461, 1.442695
          %v481 = vpow.pop %v480
          %v482 = vmul.f32 %v462, 1.442695
          %v483 = vpow.pop %v482
          %v484 = vmul.f32 %v463, 1.442695
          %v485 = vpow.pop %v484
          %v486 = vmul.f32 %v464, 1.442695
          %v487 = vpow.pop %v486
          %v488 = vmul.f32 %v465, 1.442695
          %v489 = vpow.pop %v488
          %v490 = vadd.f32 %v467, %v469
          %491 = vadd.xlane.f32.xlu0 %v490
          %v492 = vpop.xlane.xlu0 %491
          %v493 = vadd.f32 %v471, %v473
          %494 = vadd.xlane.f32.xlu0 %v493
          %v495 = vpop.xlane.xlu0 %494
          %v496 = vadd.f32 %v475, %v477
          %497 = vadd.xlane.f32.xlu0 %v496
          %v498 = vpop.xlane.xlu0 %497
          %v499 = vadd.f32 %v479, %v481
          %500 = vadd.xlane.f32.xlu0 %v499
          %v501 = vpop.xlane.xlu0 %500
          %v502 = vadd.f32 %v483, %v485
          %503 = vadd.xlane.f32.xlu0 %v502
          %v504 = vpop.xlane.xlu0 %503
          %v505 = vadd.f32 %v487, %v489
          %506 = vadd.xlane.f32.xlu0 %v505
          %v507 = vpop.xlane.xlu0 %506
          %v508 = vlog2.pop %v492
          %v509 = vmul.f32 %v508, 0.6931472
          %v510 = vlog2.pop %v495
          %v511 = vmul.f32 %v510, 0.6931472
          %v512 = vlog2.pop %v498
          %v513 = vmul.f32 %v512, 0.6931472
          %v514 = vlog2.pop %v501
          %v515 = vmul.f32 %v514, 0.6931472
          %v516 = vlog2.pop %v504
          %v517 = vmul.f32 %v516, 0.6931472
          %v518 = vlog2.pop %v507
          %v519 = vmul.f32 %v518, 0.6931472
          %v520 = vadd.f32 %v375, %v509
          %v521 = vadd.f32 %v378, %v511
          %v522 = vadd.f32 %v381, %v513
          %v523 = vadd.f32 %v384, %v515
          %v524 = vadd.f32 %v387, %v517
          %v525 = vadd.f32 %v390, %v519
          %v526 = vsub.f32 %v520, %v438
          %v527 = vsub.f32 %v521, %v441
          %v528 = vsub.f32 %v522, %v444
          %v529 = vsub.f32 %v523, %v447
          %v530 = vsub.f32 %v524, %v450
          %v531 = vsub.f32 %v525, %v453
          %v532 = vlaneseq
          %v533 = vshrl.u32 %v532, 7
          %v534 = vadd.s32 %v533, 8
          %v535 = vadd.s32 %v533, 16
          %s536 = smul.u32 %s29, 24
          %v537 = vstv %s536
          %v538 = vadd.s32 %v533, %v537
          %v539 = vadd.s32 %v534, %v537
          %v540 = vadd.s32 %v535, %v537
          %v541 = vld [vmem:[%s304] sm:$0x1]
          %v542 = vld [vmem:[%s304 + $0x1] sm:$0x1]
          %v543 = vlaneseq
          %v544 = vshrl.u32 %v543, 7
          %v545 = vsub.s32 0, %v544
          %v546 = vrot.slane %v541, %v545
          %v547 = vlaneseq
          %v548 = vshrl.u32 %v547, 7
          %v549 = vsub.s32 0, %v548
          %v550 = vrot.slane %v542, %v549
          %vm551 = vcmp.lt.s32.totalorder %v538, %v546
          %vm552 = vcmp.lt.s32.totalorder %v539, %v546
          %vm553 = vcmp.lt.s32.totalorder %v540, %v546
          %vm554 = vcmp.lt.s32.totalorder %v538, %v550
          %vm555 = vcmp.lt.s32.totalorder %v539, %v550
          %vm556 = vcmp.lt.s32.totalorder %v540, %v550
          %v557 = vld [vmem:[%s341] sm:$0x1]
          %v558 = vld [vmem:[%s341 + $0x1] sm:$0x1]
          %v559 = vsel %vm551, %v526, 0.0
          %v560 = vsel %vm552, %v527, 0.0
          %v561 = vsel %vm553, %v528, 0.0
          %v562 = vsel %vm554, %v529, 0.0
          %v563 = vsel %vm555, %v530, 0.0
          %v564 = vsel %vm556, %v531, 0.0
          %vm565 = vcmask 7168
          %v566 = vsel %vm565, %v559, 0.0
          %v567 = vsel %vm565, %v560, 0.0
          %v568 = vadd.f32 %v566, %v567
          %v569 = vsel %vm565, %v561, 0.0
          %v570 = vadd.f32 %v568, %v569
          %v571 = vrot.slane %v570, 4
          %v572 = vadd.f32 %v570, %v571
          %v573 = vrot.slane %v572, 2
          %v574 = vadd.f32 %v572, %v573
          %v575 = vrot.slane %v574, 1
          %v576 = vadd.f32 %v574, %v575
          %v577 = vsel %vm565, %v562, 0.0
          %v578 = vsel %vm565, %v563, 0.0
          %v579 = vadd.f32 %v577, %v578
          %v580 = vsel %vm565, %v564, 0.0
          %v581 = vadd.f32 %v579, %v580
          %v582 = vrot.slane %v581, 4
          %v583 = vadd.f32 %v581, %v582
          %v584 = vrot.slane %v583, 2
          %v585 = vadd.f32 %v583, %v584
          %v586 = vrot.slane %v585, 1
          %v587 = vadd.f32 %v585, %v586
          %v588 = vadd.f32 %v557, %v576
          %v589 = vadd.f32 %v558, %v587
          %vm590 = vcmask 0
          %591 = vst.msk [vmem:[%s341] sm:$0x1] %vm590, %v588
          %592 = vst.msk [vmem:[%s341 + $0x1] sm:$0x1] %vm590, %v589
        $region44: #{tpu_custom_call.1} parent=31 // pred_fallthru
          _
        %s593 = smul.u32 2, %s28
        %p594 = scmp.lt.s32.totalorder %s593, 3
        %s595 = scalar_select %p594, %s593, 3
        %s596 = scalar_lea.vmem %s4, %s595
        // Predicated region
        $region45: #{tpu_custom_call.1} parent=31 // pred_check
          %p597 = pneg %p160
        $region46: #{tpu_custom_call.1} parent=31 // pred_check_branch
          %599 = sbr.rel (%p597) target = $region48
        $region47: #{tpu_custom_call.1} parent=31 // pred_region
          %s600 = smul.u32 2, %s28
        $region48: #{tpu_custom_call.1} parent=31 // pred_fallthru
          _
      $region32: #{tpu_custom_call.1} parent=5 // pred_fallthru
        _
      %p601 = scmp.le.s32.totalorder 2, %s19
      // Predicated region
      $region49: #{tpu_custom_call.1} parent=5 // pred_check
        %p602 = pneg %p601
      $region50: #{tpu_custom_call.1} parent=5 // pred_check_branch
        %604 = sbr.rel (%p602) target = $region52
      $region51: #{tpu_custom_call.1} parent=5 // pred_region
        %s605 = ssub.s32 %s19, 2
        // Predicated region
        $region53: #{tpu_custom_call.1} parent=51 // pred_check
          %p606 = pneg %p166
        $region54: #{tpu_custom_call.1} parent=51 // pred_check_branch
          %608 = sbr.rel (%p606) target = $region56
        $region55: #{tpu_custom_call.1} parent=51 // pred_region
          %s609 = smul.u32 2, %s30
          %p610 = scmp.lt.s32.totalorder %s609, 3
          %s611 = scalar_select %p610, %s609, 3
          %s612 = scalar_lea.vmem %s4, %s611
        $region56: #{tpu_custom_call.1} parent=51 // pred_fallthru
          _
      $region52: #{tpu_custom_call.1} parent=5 // pred_fallthru
        _
    $region6: #{tpu_custom_call.1} parent=1 // loop_footer
      %s23 = sadd.s32 1, %s19
    $region7: #{tpu_custom_call.1} parent=1 // loop_footer_branch
      %18 = sbr.rel target = $region3
    $region8: #{tpu_custom_call.1} parent=1 // loop_exit
      _
    %613 = vsyncpa [#allocation5], 1
    %s614 = scalar_lea.sflag [#allocation5], 1
    %615 = vsyncpa %s614, 1

</llo_original>
